<compile_context>
chip_gen: v6e
topology: v6e:2x2x1
jax: 0.10.0
libtpu: 0.0.40
codegen_flags: <defaults>
</compile_context>

<pallas_src>
from functools import partial

import jax
import jax.numpy as jnp
from jax.experimental import pallas as pl
from jax.experimental.pallas import tpu as pltpu


def _controller_kernel(x_ref, wstat_ref, bmean_ref, gt_ref, beta_ref,
                       wl1_ref, bl1_ref, wg1_ref, bg1_ref,
                       wl2_ref, wg2_ref, b2_ref, wm_ref, bm_ref,
                       noise_ref, out_ref, *, thred, tau, training):
    x = x_ref[...].astype(jnp.float32)               # (TB, T, E)
    tb, t, e = x.shape
    inv_e = 1.0 / e

    # ---- one-pass LayerNorm statistics -------------------------------------
    # s1 = sum_E x  and  sgc = sum_E (gamma - mean(gamma)) * x  in ONE MXU
    # matmul against a tiny stationary (E, 2) RHS; only x*x stays on the VPU.
    x2d = x.reshape(tb * t, e)
    stats = jnp.dot(x2d, wstat_ref[...],
                    preferred_element_type=jnp.float32)          # (TB*T, 2)
    s1 = stats[:, 0:1].reshape(tb, t, 1)                         # sum_E x
    sgc = stats[:, 1:2].reshape(tb, t, 1)                        # sum_E gc*x
    s2 = jnp.sum(x * x, axis=-1, keepdims=True)                  # (TB, T, 1)

    mu = s1 * inv_e
    # Clamp: single-pass variance can cancel slightly negative; padded garbage
    # rows (when B % TB != 0) must not NaN through rsqrt.
    var = jnp.maximum(s2 * inv_e - mu * mu, 0.0)
    rstd = jax.lax.rsqrt(var + 1e-5)                             # (TB, T, 1)

    # ---- folded means of the LayerNorm output ------------------------------
    # x_local[b,t] = mean_E(LN(x)) = rstd * sgc / E + mean(beta)
    x_local = (rstd * sgc * inv_e + bmean_ref[...]).reshape(tb, t)      # (TB, T)

    # x_global[b,e] = mean_T(LN(x)) = (gamma/T)*(sum_T rstd*x - sum_T rstd*mu) + beta
    sx = jnp.sum(x * rstd, axis=1)                               # (TB, E)
    srm = jnp.sum(rstd * mu, axis=1)                             # (TB, 1)
    x_global = (sx - srm) * gt_ref[...] + beta_ref[...]          # (TB, E)

    # ---- local / global MLP first layers (different K dims; cannot fuse) ----
    hl = jnp.dot(jnp.maximum(x_local, 0.0), wl1_ref[...],
                 preferred_element_type=jnp.float32) + bl1_ref[...]     # (TB, 16)
    hg = jnp.dot(jnp.maximum(x_global, 0.0), wg1_ref[...],
                 preferred_element_type=jnp.float32) + bg1_ref[...]     # (TB, 16)

    # ---- second layers + add, with one fused bias (bl2 + bg2) ----
    xm = (jnp.dot(jnp.maximum(hl, 0.0), wl2_ref[...],
                  preferred_element_type=jnp.float32)
          + jnp.dot(jnp.maximum(hg, 0.0), wg2_ref[...],
                    preferred_element_type=jnp.float32)
          + b2_ref[...])                                                # (TB, E//24)

    # ---- mix head ----
    logits = jnp.dot(jnp.maximum(xm, 0.0), wm_ref[...],
                     preferred_element_type=jnp.float32) + bm_ref[...]  # (TB, 1)
    logits_row = logits.reshape(1, tb)           # lane-dense (1, TB) for the store

    # ---- gumbel sigmoid (hard=True, straight-through) ----
    if training:
        # noise = Gumbel1 - Gumbel2 ~ Logistic(0,1), pre-drawn host-side per row.
        z = (logits_row + noise_ref[0]) * (1.0 / tau)
    else:
        z = logits_row                            # eval path: plain sigmoid(logits)
    y_soft = 1.0 / (1.0 + jnp.exp(-z))
    y_hard = (y_soft >= thred).astype(jnp.float32)   # y_hard = 1 unless y_soft < thred
    # TODO(synk): the straight-through gradient needs a jax.custom_vjp around the
    # pallas_call to actually propagate; the forward value equals y_hard.
    out_ref[0] = y_hard - jax.lax.stop_gradient(y_soft) + y_soft      # (1, TB)


def _pick_block_b(batch, tokens, embed, target_f32_bytes=6 * 1024 * 1024):
    """Batch tile so one f32-equivalent x block is ~6 MiB (amortizes the
    ~0.35 us/step grid overhead on all generations), while guaranteeing at
    least 2 grid steps when B >= 2 so the parallel axis can be split across
    both v7x TensorCores."""
    row_bytes = max(1, tokens * embed * 4)
    rows = max(1, target_f32_bytes // row_bytes)
    if batch >= 2:
        rows = min(rows, -(-batch // 2))          # ceil(B/2) -> >= 2 grid steps
    rows = min(rows, batch)
    if rows >= 8:
        rows = (rows // 8) * 8                    # sublane-friendly when affordable
    return int(max(1, rows))


def _vmem_limit_bytes(tb, tokens, embed, in_itemsize):
    """Explicit scoped-VMEM budget: 2x double-buffered input block + ~3 block-
    sized f32 temporaries (upcast / x*x / rstd*x) + slack, capped at 48 MiB so
    it stays well under v7x's 64 MiB physical VMEM (and trivially under the
    128 MiB of v5e/v6e)."""
    blk_in = tb * tokens * embed * in_itemsize
    blk_f32 = tb * tokens * embed * 4
    est = 2 * blk_in + 3 * blk_f32 + (4 << 20)
    return int(min(48 << 20, max(16 << 20, est)))


def controller_forward(x, params, noise_key=None, *, thred=0.5, tau=5.0,
                       training=True, block_b=None):
    """x: (B, T, E); params from init_params; returns (B, 1) float32 mask."""
    B, T, E = x.shape
    gamma, beta, wl1, bl1, wl2, bl2, wg1, bg1, wg2, bg2, wm, bm = params
    f32 = jnp.float32

    # ---- host-side folding of the LayerNorm affine (hoisted out of the kernel)
    gamma = gamma.reshape(1, E).astype(f32)
    beta = beta.reshape(1, E).astype(f32)
    g_mean = jnp.mean(gamma)
    bmean = jnp.mean(beta).reshape(1, 1)                    # mean(beta)
    wstat = jnp.concatenate(
        [jnp.ones((E, 1), f32), (gamma - g_mean).reshape(E, 1)], axis=1)  # (E, 2)
    gt = gamma * (1.0 / T)                                  # gamma / T
    b2 = (bl2 + bg2).astype(f32)                            # fused 2nd-layer bias

    tb = block_b if block_b is not None else _pick_block_b(B, T, E)
    nb = pl.cdiv(B, tb)

    # Host-side logistic noise (== difference of two Gumbel draws, the same
    # distribution as torch's two .exponential_().log() draws).
    # TODO(synk): exact RNG stream differs from torch.Tensor.exponential_();
    # only the distribution of the injected noise matches.
    if training:
        if noise_key is None:
            noise_key = jax.random.PRNGKey(0)
        noise = jax.random.logistic(noise_key, (B, 1), dtype=f32)
    else:
        noise = jnp.zeros((B, 1), f32)
    pad = nb * tb - B
    if pad:
        noise = jnp.pad(noise, ((0, pad), (0, 0)))
    noise3 = noise.reshape(nb, 1, tb)        # lane-dense; last two dims == full dims

    def full_spec(a):
        nd = a.ndim
        return pl.BlockSpec(a.shape, lambda i, _nd=nd: (0,) * _nd)

    kernel = partial(_controller_kernel, thred=float(thred), tau=float(tau),
                     training=bool(training))

    out3 = pl.pallas_call(
        kernel,
        out_shape=jax.ShapeDtypeStruct((nb, 1, tb), jnp.float32),
        grid=(nb,),
        in_specs=[
            pl.BlockSpec((tb, T, E), lambda i: (i, 0, 0)),   # x: pipelined over B
            full_spec(wstat), full_spec(bmean), full_spec(gt), full_spec(beta),
            full_spec(wl1), full_spec(bl1),
            full_spec(wg1), full_spec(bg1),
            full_spec(wl2), full_spec(wg2), full_spec(b2),
            full_spec(wm), full_spec(bm),
            pl.BlockSpec((1, 1, tb), lambda i: (i, 0, 0)),   # per-row noise (lane-dense)
        ],
        out_specs=pl.BlockSpec((1, 1, tb), lambda i: (i, 0, 0)),
        compiler_params=pltpu.CompilerParams(
            dimension_semantics=("parallel",),               # megacore split on v7x
            vmem_limit_bytes=_vmem_limit_bytes(tb, T, E, x.dtype.itemsize)),
    )(x, wstat, bmean, gt, beta, wl1, bl1, wg1, bg1, wl2, wg2, b2, wm, bm, noise3)

    return out3.reshape(nb * tb, 1)[:B]


def init_params(key, token_dim, embed_dim):
    """Deterministic synthetic parameters; Linear weights stored as [in, out]."""
    e24 = embed_dim // 24
    ks = jax.random.split(key, 11)

    def w(k, shape, scale=0.1):
        return scale * jax.random.normal(k, shape, dtype=jnp.float32)

    gamma = 1.0 + w(ks[0], (1, embed_dim))                 # LayerNorm weight
    beta = w(ks[1], (1, embed_dim))                        # LayerNorm bias
    wl1 = w(ks[2], (token_dim, 16));  bl1 = w(ks[3], (1, 16))
    wl2 = w(ks[4], (16, e24));        bl2 = w(ks[5], (1, e24))
    wg1 = w(ks[6], (embed_dim, 16));  bg1 = w(ks[7], (1, 16))
    wg2 = w(ks[8], (16, e24));        bg2 = w(ks[9], (1, e24))
    wm  = w(ks[10], (e24, 1));        bm  = jnp.zeros((1, 1), jnp.float32)
    return (gamma, beta, wl1, bl1, wl2, bl2, wg1, bg1, wg2, bg2, wm, bm)


if __name__ == "__main__":
    # Small shapes consistent with the module: token_dim=T, embed_dim=E (E % 24 == 0).
    B, T, E = 2, 16, 48
    key = jax.random.PRNGKey(0)
    kx, kp, kn = jax.random.split(key, 3)

    x = jax.random.normal(kx, (B, T, E), dtype=jnp.float32)
    params = init_params(kp, token_dim=T, embed_dim=E)

    # training path (with host-drawn logistic noise)
    mask = controller_forward(x, params, noise_key=kn,
                              thred=0.5, tau=5.0, training=True)
    jax.block_until_ready(mask)
    assert mask.shape == (B, 1) and mask.dtype == jnp.float32
    assert bool(jnp.all(jnp.isfinite(mask)))
    # hard straight-through forward value is ~0/1 (tiny fp residue tolerated)
    assert bool(jnp.all((jnp.abs(mask) < 1e-4) | (jnp.abs(mask - 1.0) < 1e-4)))

    # eval-mode path (no noise, plain sigmoid) also exercised once
    mask_eval = controller_forward(x, params, thred=0.5, tau=5.0, training=False)
    jax.block_until_ready(mask_eval)
    assert mask_eval.shape == (B, 1)
    assert bool(jnp.all(jnp.isfinite(mask_eval)))

    # bf16 activations: kernel upcasts per block; halves HBM read traffic.
    mask_bf16 = controller_forward(x.astype(jnp.bfloat16), params, noise_key=kn,
                                   thred=0.5, tau=5.0, training=True)
    jax.block_until_ready(mask_bf16)
    assert mask_bf16.shape == (B, 1)
    assert bool(jnp.all(jnp.isfinite(mask_bf16)))

    print("KERNEL_OK")
</pallas_src>

<mosaic_0001>
module attributes {stable_mosaic.version = 11 : i64} {
  func.func @_controller_kernel(%arg0: i32, %arg1: memref<1x16x48xf32, #tpu.memory_space<vmem>>, %arg2: memref<48x2xf32, #tpu.memory_space<vmem>>, %arg3: memref<1x1xf32, #tpu.memory_space<vmem>>, %arg4: memref<1x48xf32, #tpu.memory_space<vmem>>, %arg5: memref<1x48xf32, #tpu.memory_space<vmem>>, %arg6: memref<16x16xf32, #tpu.memory_space<vmem>>, %arg7: memref<1x16xf32, #tpu.memory_space<vmem>>, %arg8: memref<48x16xf32, #tpu.memory_space<vmem>>, %arg9: memref<1x16xf32, #tpu.memory_space<vmem>>, %arg10: memref<16x2xf32, #tpu.memory_space<vmem>>, %arg11: memref<16x2xf32, #tpu.memory_space<vmem>>, %arg12: memref<1x2xf32, #tpu.memory_space<vmem>>, %arg13: memref<2x1xf32, #tpu.memory_space<vmem>>, %arg14: memref<1x1xf32, #tpu.memory_space<vmem>>, %arg15: memref<1x1x1xf32, #tpu.memory_space<vmem>>, %arg16: memref<1x1x1xf32, #tpu.memory_space<vmem>>) attributes {dimension_semantics = [#tpu.dimension_semantics<parallel>], iteration_bounds = array<i64: 2>, scalar_prefetch = 0 : i64, scratch_operands = 0 : i64, tpu.core_type = #tpu.core_type<tc>, window_params = [{transform_indices = @transform_0, window_bounds = array<i64: 1, 16, 48>}, {pipeline_mode = #tpu.pipeline_mode<synchronous>, transform_indices = @transform_1, window_bounds = array<i64: 48, 2>}, {pipeline_mode = #tpu.pipeline_mode<synchronous>, transform_indices = @transform_2, window_bounds = array<i64: 1, 1>}, {pipeline_mode = #tpu.pipeline_mode<synchronous>, transform_indices = @transform_3, window_bounds = array<i64: 1, 48>}, {pipeline_mode = #tpu.pipeline_mode<synchronous>, transform_indices = @transform_4, window_bounds = array<i64: 1, 48>}, {pipeline_mode = #tpu.pipeline_mode<synchronous>, transform_indices = @transform_5, window_bounds = array<i64: 16, 16>}, {pipeline_mode = #tpu.pipeline_mode<synchronous>, transform_indices = @transform_6, window_bounds = array<i64: 1, 16>}, {pipeline_mode = #tpu.pipeline_mode<synchronous>, transform_indices = @transform_7, window_bounds = array<i64: 48, 16>}, {pipeline_mode = #tpu.pipeline_mode<synchronous>, transform_indices = @transform_8, window_bounds = array<i64: 1, 16>}, {pipeline_mode = #tpu.pipeline_mode<synchronous>, transform_indices = @transform_9, window_bounds = array<i64: 16, 2>}, {pipeline_mode = #tpu.pipeline_mode<synchronous>, transform_indices = @transform_10, window_bounds = array<i64: 16, 2>}, {pipeline_mode = #tpu.pipeline_mode<synchronous>, transform_indices = @transform_11, window_bounds = array<i64: 1, 2>}, {pipeline_mode = #tpu.pipeline_mode<synchronous>, transform_indices = @transform_12, window_bounds = array<i64: 2, 1>}, {pipeline_mode = #tpu.pipeline_mode<synchronous>, transform_indices = @transform_13, window_bounds = array<i64: 1, 1>}, {transform_indices = @transform_14, window_bounds = array<i64: 1, 1, 1>}, {transform_indices = @transform_15, window_bounds = array<i64: 1, 1, 1>}]} {
    %c0 = arith.constant 0 : index
    %c0_0 = arith.constant 0 : index
    %c0_1 = arith.constant 0 : index
    %0 = vector.load %arg1[%c0, %c0_0, %c0_1] : memref<1x16x48xf32, #tpu.memory_space<vmem>>, vector<1x16x48xf32>
    %1 = vector.shape_cast %0 : vector<1x16x48xf32> to vector<16x48xf32>
    %c0_2 = arith.constant 0 : index
    %c0_3 = arith.constant 0 : index
    %2 = vector.load %arg2[%c0_2, %c0_3] : memref<48x2xf32, #tpu.memory_space<vmem>>, vector<48x2xf32>
    %cst = arith.constant dense<0.000000e+00> : vector<16x2xf32>
    %3 = tpu.matmul %1, %2, %cst {dimension_numbers = #tpu.dot_dimension_numbers<[1], [0], [0], [1], [0, 0, 1, 1], [], []>} : vector<16x48xf32>, vector<48x2xf32>, vector<16x2xf32> -> vector<16x2xf32>
    %4 = vector.extract_strided_slice %3 {offsets = [0, 0], sizes = [16, 1], strides = [1, 1]} : vector<16x2xf32> to vector<16x1xf32>
    %5 = vector.shape_cast %4 : vector<16x1xf32> to vector<1x16x1xf32>
    %6 = vector.extract_strided_slice %3 {offsets = [0, 1], sizes = [16, 1], strides = [1, 1]} : vector<16x2xf32> to vector<16x1xf32>
    %7 = vector.shape_cast %6 : vector<16x1xf32> to vector<1x16x1xf32>
    %8 = arith.mulf %0, %0 : vector<1x16x48xf32>
    %cst_4 = arith.constant dense<0.000000e+00> : vector<1x16xf32>
    %9 = vector.multi_reduction <add>, %8, %cst_4 [2] : vector<1x16x48xf32> to vector<1x16xf32>
    %10 = vector.shape_cast %9 : vector<1x16xf32> to vector<1x16x1xf32>
    %cst_5 = arith.constant 0.020833334 : f32
    %11 = vector.broadcast %cst_5 : f32 to vector<1x16x1xf32>
    %12 = arith.mulf %5, %11 : vector<1x16x1xf32>
    %cst_6 = arith.constant 0.020833334 : f32
    %13 = vector.broadcast %cst_6 : f32 to vector<1x16x1xf32>
    %14 = arith.mulf %10, %13 : vector<1x16x1xf32>
    %15 = arith.mulf %12, %12 : vector<1x16x1xf32>
    %16 = arith.subf %14, %15 : vector<1x16x1xf32>
    %cst_7 = arith.constant 0.000000e+00 : f32
    %17 = vector.broadcast %cst_7 : f32 to vector<1x16x1xf32>
    %18 = arith.maximumf %16, %17 : vector<1x16x1xf32>
    %cst_8 = arith.constant 9.99999974E-6 : f32
    %19 = vector.broadcast %cst_8 : f32 to vector<1x16x1xf32>
    %20 = arith.addf %18, %19 : vector<1x16x1xf32>
    %21 = math.rsqrt %20 : vector<1x16x1xf32>
    %22 = arith.mulf %21, %7 : vector<1x16x1xf32>
    %cst_9 = arith.constant 0.020833334 : f32
    %23 = vector.broadcast %cst_9 : f32 to vector<1x16x1xf32>
    %24 = arith.mulf %22, %23 : vector<1x16x1xf32>
    %c0_10 = arith.constant 0 : index
    %c0_11 = arith.constant 0 : index
    %25 = vector.load %arg3[%c0_10, %c0_11] : memref<1x1xf32, #tpu.memory_space<vmem>>, vector<1x1xf32>
    %26 = vector.shape_cast %25 : vector<1x1xf32> to vector<1x1x1xf32>
    %27 = vector.broadcast %26 : vector<1x1x1xf32> to vector<1x16x1xf32>
    %28 = arith.addf %24, %27 : vector<1x16x1xf32>
    %29 = vector.shape_cast %28 : vector<1x16x1xf32> to vector<1x16xf32>
    %30 = vector.broadcast %21 : vector<1x16x1xf32> to vector<1x16x48xf32>
    %31 = arith.mulf %0, %30 : vector<1x16x48xf32>
    %cst_12 = arith.constant dense<0.000000e+00> : vector<1x48xf32>
    %32 = vector.multi_reduction <add>, %31, %cst_12 [1] : vector<1x16x48xf32> to vector<1x48xf32>
    %33 = arith.mulf %21, %12 : vector<1x16x1xf32>
    %cst_13 = arith.constant dense<0.000000e+00> : vector<1x1xf32>
    %34 = vector.multi_reduction <add>, %33, %cst_13 [1] : vector<1x16x1xf32> to vector<1x1xf32>
    %35 = vector.broadcast %34 : vector<1x1xf32> to vector<1x48xf32>
    %36 = arith.subf %32, %35 : vector<1x48xf32>
    %c0_14 = arith.constant 0 : index
    %c0_15 = arith.constant 0 : index
    %37 = vector.load %arg4[%c0_14, %c0_15] : memref<1x48xf32, #tpu.memory_space<vmem>>, vector<1x48xf32>
    %38 = arith.mulf %36, %37 : vector<1x48xf32>
    %c0_16 = arith.constant 0 : index
    %c0_17 = arith.constant 0 : index
    %39 = vector.load %arg5[%c0_16, %c0_17] : memref<1x48xf32, #tpu.memory_space<vmem>>, vector<1x48xf32>
    %40 = arith.addf %38, %39 : vector<1x48xf32>
    %cst_18 = arith.constant 0.000000e+00 : f32
    %41 = vector.broadcast %cst_18 : f32 to vector<1x16xf32>
    %42 = arith.maximumf %29, %41 : vector<1x16xf32>
    %c0_19 = arith.constant 0 : index
    %c0_20 = arith.constant 0 : index
    %43 = vector.load %arg6[%c0_19, %c0_20] : memref<16x16xf32, #tpu.memory_space<vmem>>, vector<16x16xf32>
    %cst_21 = arith.constant dense<0.000000e+00> : vector<1x16xf32>
    %44 = tpu.matmul %42, %43, %cst_21 {dimension_numbers = #tpu.dot_dimension_numbers<[1], [0], [0], [1], [0, 0, 1, 1], [], []>} : vector<1x16xf32>, vector<16x16xf32>, vector<1x16xf32> -> vector<1x16xf32>
    %c0_22 = arith.constant 0 : index
    %c0_23 = arith.constant 0 : index
    %45 = vector.load %arg7[%c0_22, %c0_23] : memref<1x16xf32, #tpu.memory_space<vmem>>, vector<1x16xf32>
    %46 = arith.addf %44, %45 : vector<1x16xf32>
    %cst_24 = arith.constant 0.000000e+00 : f32
    %47 = vector.broadcast %cst_24 : f32 to vector<1x48xf32>
    %48 = arith.maximumf %40, %47 : vector<1x48xf32>
    %c0_25 = arith.constant 0 : index
    %c0_26 = arith.constant 0 : index
    %49 = vector.load %arg8[%c0_25, %c0_26] : memref<48x16xf32, #tpu.memory_space<vmem>>, vector<48x16xf32>
    %cst_27 = arith.constant dense<0.000000e+00> : vector<1x16xf32>
    %50 = tpu.matmul %48, %49, %cst_27 {dimension_numbers = #tpu.dot_dimension_numbers<[1], [0], [0], [1], [0, 0, 1, 1], [], []>} : vector<1x48xf32>, vector<48x16xf32>, vector<1x16xf32> -> vector<1x16xf32>
    %c0_28 = arith.constant 0 : index
    %c0_29 = arith.constant 0 : index
    %51 = vector.load %arg9[%c0_28, %c0_29] : memref<1x16xf32, #tpu.memory_space<vmem>>, vector<1x16xf32>
    %52 = arith.addf %50, %51 : vector<1x16xf32>
    %cst_30 = arith.constant 0.000000e+00 : f32
    %53 = vector.broadcast %cst_30 : f32 to vector<1x16xf32>
    %54 = arith.maximumf %46, %53 : vector<1x16xf32>
    %c0_31 = arith.constant 0 : index
    %c0_32 = arith.constant 0 : index
    %55 = vector.load %arg10[%c0_31, %c0_32] : memref<16x2xf32, #tpu.memory_space<vmem>>, vector<16x2xf32>
    %cst_33 = arith.constant dense<0.000000e+00> : vector<1x2xf32>
    %56 = tpu.matmul %54, %55, %cst_33 {dimension_numbers = #tpu.dot_dimension_numbers<[1], [0], [0], [1], [0, 0, 1, 1], [], []>} : vector<1x16xf32>, vector<16x2xf32>, vector<1x2xf32> -> vector<1x2xf32>
    %cst_34 = arith.constant 0.000000e+00 : f32
    %57 = vector.broadcast %cst_34 : f32 to vector<1x16xf32>
    %58 = arith.maximumf %52, %57 : vector<1x16xf32>
    %c0_35 = arith.constant 0 : index
    %c0_36 = arith.constant 0 : index
    %59 = vector.load %arg11[%c0_35, %c0_36] : memref<16x2xf32, #tpu.memory_space<vmem>>, vector<16x2xf32>
    %cst_37 = arith.constant dense<0.000000e+00> : vector<1x2xf32>
    %60 = tpu.matmul %58, %59, %cst_37 {dimension_numbers = #tpu.dot_dimension_numbers<[1], [0], [0], [1], [0, 0, 1, 1], [], []>} : vector<1x16xf32>, vector<16x2xf32>, vector<1x2xf32> -> vector<1x2xf32>
    %61 = arith.addf %56, %60 : vector<1x2xf32>
    %c0_38 = arith.constant 0 : index
    %c0_39 = arith.constant 0 : index
    %62 = vector.load %arg12[%c0_38, %c0_39] : memref<1x2xf32, #tpu.memory_space<vmem>>, vector<1x2xf32>
    %63 = arith.addf %61, %62 : vector<1x2xf32>
    %cst_40 = arith.constant 0.000000e+00 : f32
    %64 = vector.broadcast %cst_40 : f32 to vector<1x2xf32>
    %65 = arith.maximumf %63, %64 : vector<1x2xf32>
    %c0_41 = arith.constant 0 : index
    %c0_42 = arith.constant 0 : index
    %66 = vector.load %arg13[%c0_41, %c0_42] : memref<2x1xf32, #tpu.memory_space<vmem>>, vector<2x1xf32>
    %cst_43 = arith.constant dense<0.000000e+00> : vector<1x1xf32>
    %67 = tpu.matmul %65, %66, %cst_43 {dimension_numbers = #tpu.dot_dimension_numbers<[1], [0], [0], [1], [0, 0, 1, 1], [], []>} : vector<1x2xf32>, vector<2x1xf32>, vector<1x1xf32> -> vector<1x1xf32>
    %c0_44 = arith.constant 0 : index
    %c0_45 = arith.constant 0 : index
    %68 = vector.load %arg14[%c0_44, %c0_45] : memref<1x1xf32, #tpu.memory_space<vmem>>, vector<1x1xf32>
    %69 = arith.addf %67, %68 : vector<1x1xf32>
    %c0_46 = arith.constant 0 : index
    %c0_47 = arith.constant 0 : index
    %c0_48 = arith.constant 0 : index
    %70 = vector.load %arg15[%c0_46, %c0_47, %c0_48] : memref<1x1x1xf32, #tpu.memory_space<vmem>>, vector<1x1x1xf32>
    %71 = vector.shape_cast %70 : vector<1x1x1xf32> to vector<1x1xf32>
    %72 = arith.addf %69, %71 : vector<1x1xf32>
    %cst_49 = arith.constant 2.000000e-01 : f32
    %73 = vector.broadcast %cst_49 : f32 to vector<1x1xf32>
    %74 = arith.mulf %72, %73 : vector<1x1xf32>
    %cst_50 = arith.constant 0.000000e+00 : f32
    %75 = vector.broadcast %cst_50 : f32 to vector<1x1xf32>
    %76 = arith.subf %75, %74 : vector<1x1xf32>
    %77 = math.exp %76 : vector<1x1xf32>
    %cst_51 = arith.constant 1.000000e+00 : f32
    %78 = vector.broadcast %cst_51 : f32 to vector<1x1xf32>
    %79 = arith.addf %78, %77 : vector<1x1xf32>
    %cst_52 = arith.constant 1.000000e+00 : f32
    %80 = vector.broadcast %cst_52 : f32 to vector<1x1xf32>
    %81 = arith.divf %80, %79 : vector<1x1xf32>
    %cst_53 = arith.constant 5.000000e-01 : f32
    %82 = vector.broadcast %cst_53 : f32 to vector<1x1xf32>
    %83 = arith.cmpf oge, %81, %82 : vector<1x1xf32>
    %84 = arith.extui %83 : vector<1x1xi1> to vector<1x1xi32>
    %85 = arith.sitofp %84 : vector<1x1xi32> to vector<1x1xf32>
    %86 = arith.subf %85, %81 : vector<1x1xf32>
    %87 = arith.addf %86, %81 : vector<1x1xf32>
    %c0_54 = arith.constant 0 : index
    %c0_55 = arith.constant 0 : index
    %c0_56 = arith.constant 0 : index
    %88 = vector.load %arg16[%c0_54, %c0_55, %c0_56] : memref<1x1x1xf32, #tpu.memory_space<vmem>>, vector<1x1x1xf32>
    %89 = vector.shape_cast %88 : vector<1x1x1xf32> to vector<1x1xf32>
    %90 = vector.shape_cast %87 : vector<1x1xf32> to vector<1x1x1xf32>
    tpu.vector_store %arg16[%c0_54, %c0_55, %c0_56], %90 {strides = array<i32>} : memref<1x1x1xf32, #tpu.memory_space<vmem>>, vector<1x1x1xf32>,
    return
  }
  func.func @transform_0(%arg0: i32) -> (i32, i32, i32) {
    %c0_i32 = arith.constant 0 : i32
    %c0_i32_0 = arith.constant 0 : i32
    %c0_i32_1 = arith.constant 0 : i32
    return %arg0, %c0_i32, %c0_i32_0 : i32, i32, i32
  }
  func.func @transform_1(%arg0: i32) -> (i32, i32) {
    %c0_i32 = arith.constant 0 : i32
    %c0_i32_0 = arith.constant 0 : i32
    %c0_i32_1 = arith.constant 0 : i32
    return %c0_i32, %c0_i32_0 : i32, i32
  }
  func.func @transform_2(%arg0: i32) -> (i32, i32) {
    %c0_i32 = arith.constant 0 : i32
    %c0_i32_0 = arith.constant 0 : i32
    %c0_i32_1 = arith.constant 0 : i32
    return %c0_i32, %c0_i32_0 : i32, i32
  }
  func.func @transform_3(%arg0: i32) -> (i32, i32) {
    %c0_i32 = arith.constant 0 : i32
    %c0_i32_0 = arith.constant 0 : i32
    %c0_i32_1 = arith.constant 0 : i32
    return %c0_i32, %c0_i32_0 : i32, i32
  }
  func.func @transform_4(%arg0: i32) -> (i32, i32) {
    %c0_i32 = arith.constant 0 : i32
    %c0_i32_0 = arith.constant 0 : i32
    %c0_i32_1 = arith.constant 0 : i32
    return %c0_i32, %c0_i32_0 : i32, i32
  }
  func.func @transform_5(%arg0: i32) -> (i32, i32) {
    %c0_i32 = arith.constant 0 : i32
    %c0_i32_0 = arith.constant 0 : i32
    %c0_i32_1 = arith.constant 0 : i32
    return %c0_i32, %c0_i32_0 : i32, i32
  }
  func.func @transform_6(%arg0: i32) -> (i32, i32) {
    %c0_i32 = arith.constant 0 : i32
    %c0_i32_0 = arith.constant 0 : i32
    %c0_i32_1 = arith.constant 0 : i32
    return %c0_i32, %c0_i32_0 : i32, i32
  }
  func.func @transform_7(%arg0: i32) -> (i32, i32) {
    %c0_i32 = arith.constant 0 : i32
    %c0_i32_0 = arith.constant 0 : i32
    %c0_i32_1 = arith.constant 0 : i32
    return %c0_i32, %c0_i32_0 : i32, i32
  }
  func.func @transform_8(%arg0: i32) -> (i32, i32) {
    %c0_i32 = arith.constant 0 : i32
    %c0_i32_0 = arith.constant 0 : i32
    %c0_i32_1 = arith.constant 0 : i32
    return %c0_i32, %c0_i32_0 : i32, i32
  }
  func.func @transform_9(%arg0: i32) -> (i32, i32) {
    %c0_i32 = arith.constant 0 : i32
    %c0_i32_0 = arith.constant 0 : i32
    %c0_i32_1 = arith.constant 0 : i32
    return %c0_i32, %c0_i32_0 : i32, i32
  }
  func.func @transform_10(%arg0: i32) -> (i32, i32) {
    %c0_i32 = arith.constant 0 : i32
    %c0_i32_0 = arith.constant 0 : i32
    %c0_i32_1 = arith.constant 0 : i32
    return %c0_i32, %c0_i32_0 : i32, i32
  }
  func.func @transform_11(%arg0: i32) -> (i32, i32) {
    %c0_i32 = arith.constant 0 : i32
    %c0_i32_0 = arith.constant 0 : i32
    %c0_i32_1 = arith.constant 0 : i32
    return %c0_i32, %c0_i32_0 : i32, i32
  }
  func.func @transform_12(%arg0: i32) -> (i32, i32) {
    %c0_i32 = arith.constant 0 : i32
    %c0_i32_0 = arith.constant 0 : i32
    %c0_i32_1 = arith.constant 0 : i32
    return %c0_i32, %c0_i32_0 : i32, i32
  }
  func.func @transform_13(%arg0: i32) -> (i32, i32) {
    %c0_i32 = arith.constant 0 : i32
    %c0_i32_0 = arith.constant 0 : i32
    %c0_i32_1 = arith.constant 0 : i32
    return %c0_i32, %c0_i32_0 : i32, i32
  }
  func.func @transform_14(%arg0: i32) -> (i32, i32, i32) {
    %c0_i32 = arith.constant 0 : i32
    %c0_i32_0 = arith.constant 0 : i32
    %c0_i32_1 = arith.constant 0 : i32
    return %arg0, %c0_i32, %c0_i32_0 : i32, i32, i32
  }
  func.func @transform_15(%arg0: i32) -> (i32, i32, i32) {
    %c0_i32 = arith.constant 0 : i32
    %c0_i32_0 = arith.constant 0 : i32
    %c0_i32_1 = arith.constant 0 : i32
    return %arg0, %c0_i32, %c0_i32_0 : i32, i32, i32
  }
}

</mosaic_0001>

<llo_original>
// kernel: tpu_custom_call.1
$region0: #{tpu_custom_call.1}
  #allocation0 [shape = 'u32[]', space=smem, size = 0x4, offset = 0x4, fixed_abs, tag = 'smem constant byte address 0x4 - core index']
  #allocation1 [shape = 'u32[144,128]{1,0:T(1,128)}', space=vmem, size = 0x12000, scoped, tag = 'internal scratch']
  #allocation2 [shape = 'f32[1,1]{1,0:T(1,128)S(1)}', space=vmem, size = 0x200, scoped, tag = 'scoped memory for tpu_custom_call.1']
  #allocation3 [shape = 'f32[1,1]{1,0:T(1,128)S(1)}', space=vmem, size = 0x200, scoped, tag = 'scoped memory for tpu_custom_call.1']
  %s0 = inlined_call_operand.vmem [shape: f32[2,16,48], index: 0, kind: input, shape index: {}]
  %s1 = inlined_call_operand.vmem [shape: f32[48,2], index: 1, kind: input, shape index: {}]
  %s2 = inlined_call_operand.<no memory space> [shape: f32[1,1], index: 2, kind: input, shape index: {}]
  %s3 = inlined_call_operand.vmem [shape: f32[1,48], index: 3, kind: input, shape index: {}]
  %s4 = inlined_call_operand.vmem [shape: f32[1,48], index: 4, kind: input, shape index: {}]
  %s5 = inlined_call_operand.vmem [shape: f32[16,16], index: 5, kind: input, shape index: {}]
  %s6 = inlined_call_operand.vmem [shape: f32[1,16], index: 6, kind: input, shape index: {}]
  %s7 = inlined_call_operand.vmem [shape: f32[48,16], index: 7, kind: input, shape index: {}]
  %s8 = inlined_call_operand.vmem [shape: f32[1,16], index: 8, kind: input, shape index: {}]
  %s9 = inlined_call_operand.vmem [shape: f32[16,2], index: 9, kind: input, shape index: {}]
  %s10 = inlined_call_operand.vmem [shape: f32[16,2], index: 10, kind: input, shape index: {}]
  %s11 = inlined_call_operand.vmem [shape: f32[1,2], index: 11, kind: input, shape index: {}]
  %s12 = inlined_call_operand.vmem [shape: f32[2,1], index: 12, kind: input, shape index: {}]
  %s13 = inlined_call_operand.<no memory space> [shape: f32[1,1], index: 13, kind: input, shape index: {}]
  %s14 = inlined_call_operand.vmem [shape: f32[2,1,1], index: 14, kind: input, shape index: {}]
  %s15 = inlined_call_operand.vmem [shape: f32[2,1,1], index: 15, kind: output, shape index: {}]
  %s16 = sld [smem:[#allocation0]]
  $region93: #{tpu_custom_call.1} parent=0
    _
  %s18 = ssub.s32 1, %s16
  %s19 = scalar_select 0, %s18, %s16
  %v20 = vstv %s2
  %21 = vst [vmem:[#allocation2] sm:$0x1] %v20
  %v22 = vstv %s13
  %23 = vst [vmem:[#allocation3] sm:$0x1] %v22
  loop: start=0, step=1, limit=4
  $region2: #{tpu_custom_call.1} parent=0 // loop_pre_header
    _
  $region3: #{tpu_custom_call.1} parent=0 // loop_header
    %s25 = sphi 0, %s29
    %p26 = scmp.ge.s32.totalorder %s25, 4
    %s35 = sphi 0, %s37
    %s38 = sphi 0, %s35
    %s39 = sphi 0, %s38
    %s55 = sphi 0, %s39
    %s59 = sphi 0, %s59
    %s61 = sphi 0, %s59
    %s62 = sphi 0, %s61
    %s76 = sphi 0, %s62
    %s80 = sphi 0, %s80
    %s82 = sphi 0, %s80
    %s83 = sphi 0, %s82
    %s97 = sphi 0, %s83
    %s101 = sphi 0, %s101
    %s103 = sphi 0, %s101
    %s104 = sphi 0, %s103
    %s118 = sphi 0, %s104
    %s122 = sphi 0, %s122
    %s124 = sphi 0, %s122
    %s125 = sphi 0, %s124
    %s139 = sphi 0, %s125
    %s143 = sphi 0, %s143
    %s145 = sphi 0, %s143
    %s146 = sphi 0, %s145
    %s160 = sphi 0, %s146
    %s164 = sphi 0, %s164
    %s166 = sphi 0, %s164
    %s167 = sphi 0, %s166
    %s181 = sphi 0, %s167
    %s185 = sphi 0, %s185
    %s187 = sphi 0, %s185
    %s188 = sphi 0, %s187
    %s202 = sphi 0, %s188
    %s206 = sphi 0, %s206
    %s208 = sphi 0, %s206
    %s209 = sphi 0, %s208
    %s223 = sphi 0, %s209
    %s227 = sphi 0, %s227
    %s229 = sphi 0, %s227
    %s230 = sphi 0, %s229
    %s244 = sphi 0, %s230
    %s248 = sphi 0, %s248
    %s250 = sphi 0, %s248
    %s251 = sphi 0, %s250
    %s265 = sphi 0, %s251
    %s269 = sphi 0, %s269
    %s271 = sphi 0, %s269
    %s272 = sphi 0, %s271
    %s286 = sphi 0, %s272
    %s290 = sphi 0, %s290
    %s292 = sphi 0, %s290
    %s293 = sphi 0, %s292
    %s307 = sphi 0, %s293
    %s311 = sphi 0, %s311
    %s313 = sphi 0, %s311
    %s314 = sphi 0, %s313
    %s328 = sphi 0, %s314
    %s334 = sphi 0, %s336
    %s337 = sphi 0, %s334
    %s338 = sphi 0, %s337
    %s354 = sphi 0, %s338
    %s360 = sphi 0, %s362
    %s363 = sphi 0, %s360
    %s364 = sphi 0, %s363
    %s380 = sphi 0, %s364
  $region4: #{tpu_custom_call.1} parent=0 // loop_header_branch
    %28 = sbr.rel (%p26) target = $region8
  $region5: #{tpu_custom_call.1} parent=0 // loop_body
    %s30 = ssub.s32 %s25, 1
    %s31 = ssub.s32 %s25, 2
    %s32 = sadd.s32 %s25, 1
    %s33 = ssub.s32 %s25, %s32
    %p34 = scmp.eq.s32.totalorder %s33, 0
    %s36 = sadd.s32 %s35, 1
    %s37 = scalar_select %p34, %s35, %s36
    %p40 = pneg %p34
    %p41 = scmp.eq.s32.totalorder %s25, 1
    %p42 = por %p40, %p41
    %p43 = scmp.ne.s32.totalorder %s35, %s38
    %p44 = scmp.eq.s32.totalorder %s25, 0
    %p45 = por %p43, %p44
    %p46 = scmp.ne.s32.totalorder %s35, %s38
    %p47 = scmp.eq.s32.totalorder %s30, 1
    %p48 = por %p46, %p47
    %p49 = scmp.ne.s32.totalorder %s38, %s39
    %p50 = scmp.eq.s32.totalorder %s30, 0
    %p51 = por %p49, %p50
    %p52 = scmp.ne.s32.totalorder %s38, %s39
    %p53 = scmp.eq.s32.totalorder %s31, 1
    %p54 = por %p52, %p53
    %p56 = scmp.ne.s32.totalorder %s39, %s55
    %p57 = scmp.eq.s32.totalorder %s31, 0
    %p58 = por %p56, %p57
    %s60 = sadd.s32 %s59, 1
    %p63 = scmp.eq.s32.totalorder %s25, 1
    %p64 = scmp.ne.s32.totalorder %s59, %s61
    %p65 = scmp.eq.s32.totalorder %s25, 0
    %p66 = por %p64, %p65
    %p67 = scmp.ne.s32.totalorder %s59, %s61
    %p68 = scmp.eq.s32.totalorder %s30, 1
    %p69 = por %p67, %p68
    %p70 = scmp.ne.s32.totalorder %s61, %s62
    %p71 = scmp.eq.s32.totalorder %s30, 0
    %p72 = por %p70, %p71
    %p73 = scmp.ne.s32.totalorder %s61, %s62
    %p74 = scmp.eq.s32.totalorder %s31, 1
    %p75 = por %p73, %p74
    %p77 = scmp.ne.s32.totalorder %s62, %s76
    %p78 = scmp.eq.s32.totalorder %s31, 0
    %p79 = por %p77, %p78
    %s81 = sadd.s32 %s80, 1
    %p84 = scmp.eq.s32.totalorder %s25, 1
    %p85 = scmp.ne.s32.totalorder %s80, %s82
    %p86 = scmp.eq.s32.totalorder %s25, 0
    %p87 = por %p85, %p86
    %p88 = scmp.ne.s32.totalorder %s80, %s82
    %p89 = scmp.eq.s32.totalorder %s30, 1
    %p90 = por %p88, %p89
    %p91 = scmp.ne.s32.totalorder %s82, %s83
    %p92 = scmp.eq.s32.totalorder %s30, 0
    %p93 = por %p91, %p92
    %p94 = scmp.ne.s32.totalorder %s82, %s83
    %p95 = scmp.eq.s32.totalorder %s31, 1
    %p96 = por %p94, %p95
    %p98 = scmp.ne.s32.totalorder %s83, %s97
    %p99 = scmp.eq.s32.totalorder %s31, 0
    %p100 = por %p98, %p99
    %s102 = sadd.s32 %s101, 1
    %p105 = scmp.eq.s32.totalorder %s25, 1
    %p106 = scmp.ne.s32.totalorder %s101, %s103
    %p107 = scmp.eq.s32.totalorder %s25, 0
    %p108 = por %p106, %p107
    %p109 = scmp.ne.s32.totalorder %s101, %s103
    %p110 = scmp.eq.s32.totalorder %s30, 1
    %p111 = por %p109, %p110
    %p112 = scmp.ne.s32.totalorder %s103, %s104
    %p113 = scmp.eq.s32.totalorder %s30, 0
    %p114 = por %p112, %p113
    %p115 = scmp.ne.s32.totalorder %s103, %s104
    %p116 = scmp.eq.s32.totalorder %s31, 1
    %p117 = por %p115, %p116
    %p119 = scmp.ne.s32.totalorder %s104, %s118
    %p120 = scmp.eq.s32.totalorder %s31, 0
    %p121 = por %p119, %p120
    %s123 = sadd.s32 %s122, 1
    %p126 = scmp.eq.s32.totalorder %s25, 1
    %p127 = scmp.ne.s32.totalorder %s122, %s124
    %p128 = scmp.eq.s32.totalorder %s25, 0
    %p129 = por %p127, %p128
    %p130 = scmp.ne.s32.totalorder %s122, %s124
    %p131 = scmp.eq.s32.totalorder %s30, 1
    %p132 = por %p130, %p131
    %p133 = scmp.ne.s32.totalorder %s124, %s125
    %p134 = scmp.eq.s32.totalorder %s30, 0
    %p135 = por %p133, %p134
    %p136 = scmp.ne.s32.totalorder %s124, %s125
    %p137 = scmp.eq.s32.totalorder %s31, 1
    %p138 = por %p136, %p137
    %p140 = scmp.ne.s32.totalorder %s125, %s139
    %p141 = scmp.eq.s32.totalorder %s31, 0
    %p142 = por %p140, %p141
    %s144 = sadd.s32 %s143, 1
    %p147 = scmp.eq.s32.totalorder %s25, 1
    %p148 = scmp.ne.s32.totalorder %s143, %s145
    %p149 = scmp.eq.s32.totalorder %s25, 0
    %p150 = por %p148, %p149
    %p151 = scmp.ne.s32.totalorder %s143, %s145
    %p152 = scmp.eq.s32.totalorder %s30, 1
    %p153 = por %p151, %p152
    %p154 = scmp.ne.s32.totalorder %s145, %s146
    %p155 = scmp.eq.s32.totalorder %s30, 0
    %p156 = por %p154, %p155
    %p157 = scmp.ne.s32.totalorder %s145, %s146
    %p158 = scmp.eq.s32.totalorder %s31, 1
    %p159 = por %p157, %p158
    %p161 = scmp.ne.s32.totalorder %s146, %s160
    %p162 = scmp.eq.s32.totalorder %s31, 0
    %p163 = por %p161, %p162
    %s165 = sadd.s32 %s164, 1
    %p168 = scmp.eq.s32.totalorder %s25, 1
    %p169 = scmp.ne.s32.totalorder %s164, %s166
    %p170 = scmp.eq.s32.totalorder %s25, 0
    %p171 = por %p169, %p170
    %p172 = scmp.ne.s32.totalorder %s164, %s166
    %p173 = scmp.eq.s32.totalorder %s30, 1
    %p174 = por %p172, %p173
    %p175 = scmp.ne.s32.totalorder %s166, %s167
    %p176 = scmp.eq.s32.totalorder %s30, 0
    %p177 = por %p175, %p176
    %p178 = scmp.ne.s32.totalorder %s166, %s167
    %p179 = scmp.eq.s32.totalorder %s31, 1
    %p180 = por %p178, %p179
    %p182 = scmp.ne.s32.totalorder %s167, %s181
    %p183 = scmp.eq.s32.totalorder %s31, 0
    %p184 = por %p182, %p183
    %s186 = sadd.s32 %s185, 1
    %p189 = scmp.eq.s32.totalorder %s25, 1
    %p190 = scmp.ne.s32.totalorder %s185, %s187
    %p191 = scmp.eq.s32.totalorder %s25, 0
    %p192 = por %p190, %p191
    %p193 = scmp.ne.s32.totalorder %s185, %s187
    %p194 = scmp.eq.s32.totalorder %s30, 1
    %p195 = por %p193, %p194
    %p196 = scmp.ne.s32.totalorder %s187, %s188
    %p197 = scmp.eq.s32.totalorder %s30, 0
    %p198 = por %p196, %p197
    %p199 = scmp.ne.s32.totalorder %s187, %s188
    %p200 = scmp.eq.s32.totalorder %s31, 1
    %p201 = por %p199, %p200
    %p203 = scmp.ne.s32.totalorder %s188, %s202
    %p204 = scmp.eq.s32.totalorder %s31, 0
    %p205 = por %p203, %p204
    %s207 = sadd.s32 %s206, 1
    %p210 = scmp.eq.s32.totalorder %s25, 1
    %p211 = scmp.ne.s32.totalorder %s206, %s208
    %p212 = scmp.eq.s32.totalorder %s25, 0
    %p213 = por %p211, %p212
    %p214 = scmp.ne.s32.totalorder %s206, %s208
    %p215 = scmp.eq.s32.totalorder %s30, 1
    %p216 = por %p214, %p215
    %p217 = scmp.ne.s32.totalorder %s208, %s209
    %p218 = scmp.eq.s32.totalorder %s30, 0
    %p219 = por %p217, %p218
    %p220 = scmp.ne.s32.totalorder %s208, %s209
    %p221 = scmp.eq.s32.totalorder %s31, 1
    %p222 = por %p220, %p221
    %p224 = scmp.ne.s32.totalorder %s209, %s223
    %p225 = scmp.eq.s32.totalorder %s31, 0
    %p226 = por %p224, %p225
    %s228 = sadd.s32 %s227, 1
    %p231 = scmp.eq.s32.totalorder %s25, 1
    %p232 = scmp.ne.s32.totalorder %s227, %s229
    %p233 = scmp.eq.s32.totalorder %s25, 0
    %p234 = por %p232, %p233
    %p235 = scmp.ne.s32.totalorder %s227, %s229
    %p236 = scmp.eq.s32.totalorder %s30, 1
    %p237 = por %p235, %p236
    %p238 = scmp.ne.s32.totalorder %s229, %s230
    %p239 = scmp.eq.s32.totalorder %s30, 0
    %p240 = por %p238, %p239
    %p241 = scmp.ne.s32.totalorder %s229, %s230
    %p242 = scmp.eq.s32.totalorder %s31, 1
    %p243 = por %p241, %p242
    %p245 = scmp.ne.s32.totalorder %s230, %s244
    %p246 = scmp.eq.s32.totalorder %s31, 0
    %p247 = por %p245, %p246
    %s249 = sadd.s32 %s248, 1
    %p252 = scmp.eq.s32.totalorder %s25, 1
    %p253 = scmp.ne.s32.totalorder %s248, %s250
    %p254 = scmp.eq.s32.totalorder %s25, 0
    %p255 = por %p253, %p254
    %p256 = scmp.ne.s32.totalorder %s248, %s250
    %p257 = scmp.eq.s32.totalorder %s30, 1
    %p258 = por %p256, %p257
    %p259 = scmp.ne.s32.totalorder %s250, %s251
    %p260 = scmp.eq.s32.totalorder %s30, 0
    %p261 = por %p259, %p260
    %p262 = scmp.ne.s32.totalorder %s250, %s251
    %p263 = scmp.eq.s32.totalorder %s31, 1
    %p264 = por %p262, %p263
    %p266 = scmp.ne.s32.totalorder %s251, %s265
    %p267 = scmp.eq.s32.totalorder %s31, 0
    %p268 = por %p266, %p267
    %s270 = sadd.s32 %s269, 1
    %p273 = scmp.eq.s32.totalorder %s25, 1
    %p274 = scmp.ne.s32.totalorder %s269, %s271
    %p275 = scmp.eq.s32.totalorder %s25, 0
    %p276 = por %p274, %p275
    %p277 = scmp.ne.s32.totalorder %s269, %s271
    %p278 = scmp.eq.s32.totalorder %s30, 1
    %p279 = por %p277, %p278
    %p280 = scmp.ne.s32.totalorder %s271, %s272
    %p281 = scmp.eq.s32.totalorder %s30, 0
    %p282 = por %p280, %p281
    %p283 = scmp.ne.s32.totalorder %s271, %s272
    %p284 = scmp.eq.s32.totalorder %s31, 1
    %p285 = por %p283, %p284
    %p287 = scmp.ne.s32.totalorder %s272, %s286
    %p288 = scmp.eq.s32.totalorder %s31, 0
    %p289 = por %p287, %p288
    %s291 = sadd.s32 %s290, 1
    %p294 = scmp.eq.s32.totalorder %s25, 1
    %p295 = scmp.ne.s32.totalorder %s290, %s292
    %p296 = scmp.eq.s32.totalorder %s25, 0
    %p297 = por %p295, %p296
    %p298 = scmp.ne.s32.totalorder %s290, %s292
    %p299 = scmp.eq.s32.totalorder %s30, 1
    %p300 = por %p298, %p299
    %p301 = scmp.ne.s32.totalorder %s292, %s293
    %p302 = scmp.eq.s32.totalorder %s30, 0
    %p303 = por %p301, %p302
    %p304 = scmp.ne.s32.totalorder %s292, %s293
    %p305 = scmp.eq.s32.totalorder %s31, 1
    %p306 = por %p304, %p305
    %p308 = scmp.ne.s32.totalorder %s293, %s307
    %p309 = scmp.eq.s32.totalorder %s31, 0
    %p310 = por %p308, %p309
    %s312 = sadd.s32 %s311, 1
    %p315 = scmp.eq.s32.totalorder %s25, 1
    %p316 = scmp.ne.s32.totalorder %s311, %s313
    %p317 = scmp.eq.s32.totalorder %s25, 0
    %p318 = por %p316, %p317
    %p319 = scmp.ne.s32.totalorder %s311, %s313
    %p320 = scmp.eq.s32.totalorder %s30, 1
    %p321 = por %p319, %p320
    %p322 = scmp.ne.s32.totalorder %s313, %s314
    %p323 = scmp.eq.s32.totalorder %s30, 0
    %p324 = por %p322, %p323
    %p325 = scmp.ne.s32.totalorder %s313, %s314
    %p326 = scmp.eq.s32.totalorder %s31, 1
    %p327 = por %p325, %p326
    %p329 = scmp.ne.s32.totalorder %s314, %s328
    %p330 = scmp.eq.s32.totalorder %s31, 0
    %p331 = por %p329, %p330
    %s332 = ssub.s32 %s25, %s32
    %p333 = scmp.eq.s32.totalorder %s332, 0
    %s335 = sadd.s32 %s334, 1
    %s336 = scalar_select %p333, %s334, %s335
    %p339 = pneg %p333
    %p340 = scmp.eq.s32.totalorder %s25, 1
    %p341 = por %p339, %p340
    %p342 = scmp.ne.s32.totalorder %s334, %s337
    %p343 = scmp.eq.s32.totalorder %s25, 0
    %p344 = por %p342, %p343
    %p345 = scmp.ne.s32.totalorder %s334, %s337
    %p346 = scmp.eq.s32.totalorder %s30, 1
    %p347 = por %p345, %p346
    %p348 = scmp.ne.s32.totalorder %s337, %s338
    %p349 = scmp.eq.s32.totalorder %s30, 0
    %p350 = por %p348, %p349
    %p351 = scmp.ne.s32.totalorder %s337, %s338
    %p352 = scmp.eq.s32.totalorder %s31, 1
    %p353 = por %p351, %p352
    %p355 = scmp.ne.s32.totalorder %s338, %s354
    %p356 = scmp.eq.s32.totalorder %s31, 0
    %p357 = por %p355, %p356
    %s358 = ssub.s32 %s25, %s32
    %p359 = scmp.eq.s32.totalorder %s358, 0
    %s361 = sadd.s32 %s360, 1
    %s362 = scalar_select %p359, %s360, %s361
    %p365 = pneg %p359
    %p366 = scmp.eq.s32.totalorder %s25, 1
    %p367 = por %p365, %p366
    %p368 = scmp.ne.s32.totalorder %s360, %s363
    %p369 = scmp.eq.s32.totalorder %s25, 0
    %p370 = por %p368, %p369
    %p371 = scmp.ne.s32.totalorder %s360, %s363
    %p372 = scmp.eq.s32.totalorder %s30, 1
    %p373 = por %p371, %p372
    %p374 = scmp.ne.s32.totalorder %s363, %s364
    %p375 = scmp.eq.s32.totalorder %s30, 0
    %p376 = por %p374, %p375
    %p377 = scmp.ne.s32.totalorder %s363, %s364
    %p378 = scmp.eq.s32.totalorder %s31, 1
    %p379 = por %p377, %p378
    %p381 = scmp.ne.s32.totalorder %s364, %s380
    %p382 = scmp.eq.s32.totalorder %s31, 0
    %p383 = por %p381, %p382
    %p384 = scmp.le.s32.totalorder 1, %s25
    %p385 = scmp.lt.s32.totalorder %s25, 3
    %p386 = pnand %p384, %p385
    %p387 = pneg %p386
    // Predicated region
    $region9: #{tpu_custom_call.1} parent=5 // pred_check
      _
    $region10: #{tpu_custom_call.1} parent=5 // pred_check_branch
      %389 = sbr.rel (%p386) target = $region12
    $region11: #{tpu_custom_call.1} parent=5 // pred_region
      %s390 = ssub.s32 %s25, 1
      // Predicated region
      $region13: #{tpu_custom_call.1} parent=11 // pred_check
        %p391 = pneg %p72
      $region14: #{tpu_custom_call.1} parent=11 // pred_check_branch
        %393 = sbr.rel (%p391) target = $region16
      $region15: #{tpu_custom_call.1} parent=11 // pred_region
        _
      $region16: #{tpu_custom_call.1} parent=11 // pred_fallthru
        _
      // Predicated region
      $region17: #{tpu_custom_call.1} parent=11 // pred_check
        %p394 = pneg %p93
      $region18: #{tpu_custom_call.1} parent=11 // pred_check_branch
        %396 = sbr.rel (%p394) target = $region20
      $region19: #{tpu_custom_call.1} parent=11 // pred_region
        _
      $region20: #{tpu_custom_call.1} parent=11 // pred_fallthru
        _
      // Predicated region
      $region21: #{tpu_custom_call.1} parent=11 // pred_check
        %p397 = pneg %p114
      $region22: #{tpu_custom_call.1} parent=11 // pred_check_branch
        %399 = sbr.rel (%p397) target = $region24
      $region23: #{tpu_custom_call.1} parent=11 // pred_region
        _
      $region24: #{tpu_custom_call.1} parent=11 // pred_fallthru
        _
      // Predicated region
      $region25: #{tpu_custom_call.1} parent=11 // pred_check
        %p400 = pneg %p135
      $region26: #{tpu_custom_call.1} parent=11 // pred_check_branch
        %402 = sbr.rel (%p400) target = $region28
      $region27: #{tpu_custom_call.1} parent=11 // pred_region
        _
      $region28: #{tpu_custom_call.1} parent=11 // pred_fallthru
        _
      // Predicated region
      $region29: #{tpu_custom_call.1} parent=11 // pred_check
        %p403 = pneg %p156
      $region30: #{tpu_custom_call.1} parent=11 // pred_check_branch
        %405 = sbr.rel (%p403) target = $region32
      $region31: #{tpu_custom_call.1} parent=11 // pred_region
        _
      $region32: #{tpu_custom_call.1} parent=11 // pred_fallthru
        _
      // Predicated region
      $region33: #{tpu_custom_call.1} parent=11 // pred_check
        %p406 = pneg %p177
      $region34: #{tpu_custom_call.1} parent=11 // pred_check_branch
        %408 = sbr.rel (%p406) target = $region36
      $region35: #{tpu_custom_call.1} parent=11 // pred_region
        _
      $region36: #{tpu_custom_call.1} parent=11 // pred_fallthru
        _
      // Predicated region
      $region37: #{tpu_custom_call.1} parent=11 // pred_check
        %p409 = pneg %p198
      $region38: #{tpu_custom_call.1} parent=11 // pred_check_branch
        %411 = sbr.rel (%p409) target = $region40
      $region39: #{tpu_custom_call.1} parent=11 // pred_region
        _
      $region40: #{tpu_custom_call.1} parent=11 // pred_fallthru
        _
      // Predicated region
      $region41: #{tpu_custom_call.1} parent=11 // pred_check
        %p412 = pneg %p219
      $region42: #{tpu_custom_call.1} parent=11 // pred_check_branch
        %414 = sbr.rel (%p412) target = $region44
      $region43: #{tpu_custom_call.1} parent=11 // pred_region
        _
      $region44: #{tpu_custom_call.1} parent=11 // pred_fallthru
        _
      // Predicated region
      $region45: #{tpu_custom_call.1} parent=11 // pred_check
        %p415 = pneg %p240
      $region46: #{tpu_custom_call.1} parent=11 // pred_check_branch
        %417 = sbr.rel (%p415) target = $region48
      $region47: #{tpu_custom_call.1} parent=11 // pred_region
        _
      $region48: #{tpu_custom_call.1} parent=11 // pred_fallthru
        _
      // Predicated region
      $region49: #{tpu_custom_call.1} parent=11 // pred_check
        %p418 = pneg %p261
      $region50: #{tpu_custom_call.1} parent=11 // pred_check_branch
        %420 = sbr.rel (%p418) target = $region52
      $region51: #{tpu_custom_call.1} parent=11 // pred_region
        _
      $region52: #{tpu_custom_call.1} parent=11 // pred_fallthru
        _
      // Predicated region
      $region53: #{tpu_custom_call.1} parent=11 // pred_check
        %p421 = pneg %p282
      $region54: #{tpu_custom_call.1} parent=11 // pred_check_branch
        %423 = sbr.rel (%p421) target = $region56
      $region55: #{tpu_custom_call.1} parent=11 // pred_region
        _
      $region56: #{tpu_custom_call.1} parent=11 // pred_fallthru
        _
      // Predicated region
      $region57: #{tpu_custom_call.1} parent=11 // pred_check
        %p424 = pneg %p303
      $region58: #{tpu_custom_call.1} parent=11 // pred_check_branch
        %426 = sbr.rel (%p424) target = $region60
      $region59: #{tpu_custom_call.1} parent=11 // pred_region
        _
      $region60: #{tpu_custom_call.1} parent=11 // pred_fallthru
        _
      // Predicated region
      $region61: #{tpu_custom_call.1} parent=11 // pred_check
        %p427 = pneg %p324
      $region62: #{tpu_custom_call.1} parent=11 // pred_check_branch
        %429 = sbr.rel (%p427) target = $region64
      $region63: #{tpu_custom_call.1} parent=11 // pred_region
        _
      $region64: #{tpu_custom_call.1} parent=11 // pred_fallthru
        _
    $region12: #{tpu_custom_call.1} parent=5 // pred_fallthru
      _
    %p430 = scmp.lt.s32.totalorder %s25, 2
    // Predicated region
    $region65: #{tpu_custom_call.1} parent=5 // pred_check
      %p431 = pneg %p430
    $region66: #{tpu_custom_call.1} parent=5 // pred_check_branch
      %433 = sbr.rel (%p431) target = $region68
    $region67: #{tpu_custom_call.1} parent=5 // pred_region
      // Predicated region
      $region69: #{tpu_custom_call.1} parent=67 // pred_check
        %p434 = pneg %p45
      $region70: #{tpu_custom_call.1} parent=67 // pred_check_branch
        %436 = sbr.rel (%p434) target = $region72
      $region71: #{tpu_custom_call.1} parent=67 // pred_region
        %p437 = scmp.lt.s32.totalorder %s25, 1
        %s438 = scalar_select %p437, %s25, 1
        %s439 = smul.addr %s438, 2
        %s440 = smul.addr %s439, 8
        %s441 = scalar_lea.vmem %s0, %s440
      $region72: #{tpu_custom_call.1} parent=67 // pred_fallthru
        _
      // Predicated region
      $region73: #{tpu_custom_call.1} parent=67 // pred_check
        %p442 = pneg %p344
      $region74: #{tpu_custom_call.1} parent=67 // pred_check_branch
        %444 = sbr.rel (%p442) target = $region76
      $region75: #{tpu_custom_call.1} parent=67 // pred_region
        %p445 = scmp.lt.s32.totalorder %s25, 1
        %s446 = scalar_select %p445, %s25, 1
        %s447 = scalar_lea.vmem %s14, %s446
      $region76: #{tpu_custom_call.1} parent=67 // pred_fallthru
        _
    $region68: #{tpu_custom_call.1} parent=5 // pred_fallthru
      _
    %p448 = scmp.le.s32.totalorder 1, %s25
    %p449 = scmp.lt.s32.totalorder %s25, 3
    %p450 = pnand %p448, %p449
    %p451 = pneg %p450
    // Predicated region
    $region77: #{tpu_custom_call.1} parent=5 // pred_check
      _
    $region78: #{tpu_custom_call.1} parent=5 // pred_check_branch
      %453 = sbr.rel (%p450) target = $region80
    $region79: #{tpu_custom_call.1} parent=5 // pred_region
      %s454 = ssub.s32 %s25, 1
      %p455 = scmp.lt.s32.totalorder %s30, 1
      %s456 = scalar_select %p455, %s30, 1
      %s457 = smul.addr %s456, 2
      %s458 = smul.addr %s457, 8
      %s459 = scalar_lea.vmem %s0, %s458
      %p460 = pneg %p51
      %p461 = pneg %p48
      %p462 = pneg %p72
      %p463 = pneg %p69
      %p464 = pneg %p93
      %p465 = pneg %p90
      %p466 = pneg %p114
      %p467 = pneg %p111
      %p468 = pneg %p135
      %p469 = pneg %p132
      %p470 = pneg %p156
      %p471 = pneg %p153
      %p472 = pneg %p177
      %p473 = pneg %p174
      %p474 = pneg %p198
      %p475 = pneg %p195
      %p476 = pneg %p219
      %p477 = pneg %p216
      %p478 = pneg %p240
      %p479 = pneg %p237
      %p480 = pneg %p261
      %p481 = pneg %p258
      %p482 = pneg %p282
      %p483 = pneg %p279
      %p484 = pneg %p303
      %p485 = pneg %p300
      %p486 = pneg %p324
      %p487 = pneg %p321
      %p488 = scmp.lt.s32.totalorder %s30, 1
      %s489 = scalar_select %p488, %s30, 1
      %s490 = scalar_lea.vmem %s14, %s489
      %p491 = pneg %p350
      %p492 = pneg %p347
      %p493 = pneg %p376
      %p494 = pneg %p373
      %p495 = scmp.lt.s32.totalorder %s30, 1
      %s496 = scalar_select %p495, %s30, 1
      %s497 = scalar_lea.vmem %s15, %s496
      %p498 = scmp.lt.s32.totalorder %s30, 1
      %s499 = scalar_select %p498, %s30, 1
      %s500 = smul.addr %s499, 2
      %s501 = smul.addr %s500, 8
      %s502 = scalar_lea.vmem %s0, %s501
      %p503 = scmp.lt.s32.totalorder %s30, 1
      %s504 = scalar_select %p503, %s30, 1
      %s505 = scalar_lea.vmem %s14, %s504
      %p506 = scmp.lt.s32.totalorder %s30, 1
      %s507 = scalar_select %p506, %s30, 1
      %s508 = scalar_lea.vmem %s15, %s507
      %v509 = vld [vmem:[%s502] sm:$0xff]
      %v510 = vld [vmem:[%s502 + $0x8] sm:$0xff]
      %v511 = vld [vmem:[%s1] sm:$0xff]
      %v512 = vld [vmem:[%s1 + $0x8] sm:$0xff]
      %v513 = vld [vmem:[%s1 + $0x10] sm:$0xff]
      %v514 = vld [vmem:[%s1 + $0x18] sm:$0xff]
      %v515 = vld [vmem:[%s1 + $0x20] sm:$0xff]
      %v516 = vld [vmem:[%s1 + $0x28] sm:$0xff]
      %vm517 = vcmask 392192
      %v519 = vsel %vm517, %v509, 0
      %v522 = vsel %vm517, %v510, 0
      %524 = vmatprep.subr.mxu0 0.0
      %525 = vmatpush1.msra.mxu0 0.0
      %526 = vmatprep.subr.mxu0 0.0
      %527 = vmatpush1.msra.mxu0 0.0
      %528 = vmatprep.subr.mxu0 0.0
      %529 = vmatpush1.msra.mxu0 0.0
      %530 = vmatprep.subr.mxu0 0.0
      %531 = vmatpush1.msra.mxu0 0.0
      %532 = vmatprep.subr.mxu0 0.0
      %533 = vmatpush1.msra.mxu0 0.0
      %534 = vmatprep.subr.mxu0 0.0
      %535 = vmatpush1.msra.mxu0 0.0
      %536 = vmatprep.subr.mxu0 0.0
      %537 = vmatpush1.msra.mxu0 0.0
      %538 = vmatprep.subr.mxu0 0.0
      %539 = vmatpush1.msra.mxu0 0.0
      %540 = vmatprep.subr.mxu0 0.0
      %541 = vmatpush1.msra.mxu0 0.0
      %542 = vmatprep.subr.mxu0 0.0
      %543 = vmatpush1.msra.mxu0 0.0
      %544 = vmatprep.subr.mxu0 0.0
      %545 = vmatpush1.msra.mxu0 %v516
      %546 = vmatprep.subr.mxu0 0.0
      %547 = vmatpush1.msra.mxu0 %v515
      %548 = vmatprep.subr.mxu0 0.0
      %549 = vmatpush1.msra.mxu0 %v514
      %550 = vmatprep.subr.mxu0 0.0
      %551 = vmatpush1.msra.mxu0 %v513
      %552 = vmatprep.subr.mxu0 0.0
      %553 = vmatpush1.msra.mxu0 %v512
      %554 = vmatprep.subr.mxu0 0.0
      %555 = vmatpush1.msra.mxu0 %v511
      %556 = vmatprep.subr.mxu0 0.0
      %557 = vmatpush2.msra.mxu0 0.0
      %558 = vmatprep.subr.mxu0 0.0
      %559 = vmatpush2.msra.mxu0 0.0
      %560 = vmatprep.subr.mxu0 0.0
      %561 = vmatpush2.msra.mxu0 0.0
      %562 = vmatprep.subr.mxu0 0.0
      %563 = vmatpush2.msra.mxu0 0.0
      %564 = vmatprep.subr.mxu0 0.0
      %565 = vmatpush2.msra.mxu0 0.0
      %566 = vmatprep.subr.mxu0 0.0
      %567 = vmatpush2.msra.mxu0 0.0
      %568 = vmatprep.subr.mxu0 0.0
      %569 = vmatpush2.msra.mxu0 0.0
      %570 = vmatprep.subr.mxu0 0.0
      %571 = vmatpush2.msra.mxu0 0.0
      %572 = vmatprep.subr.mxu0 0.0
      %573 = vmatpush2.msra.mxu0 0.0
      %574 = vmatprep.subr.mxu0 0.0
      %575 = vmatpush2.msra.mxu0 0.0
      %576 = vmatprep.subr.mxu0 0.0
      %577 = vmatpush2.msra.mxu0 0.0
      %578 = vmatprep.subr.mxu0 0.0
      %579 = vmatpush2.msra.mxu0 0.0
      %580 = vmatprep.subr.mxu0 0.0
      %581 = vmatpush2.msra.mxu0 0.0
      %582 = vmatprep.subr.mxu0 0.0
      %583 = vmatpush2.msra.mxu0 0.0
      %584 = vmatprep.subr.mxu0 0.0
      %585 = vmatpush2.msra.mxu0 0.0
      %586 = vmatprep.subr.mxu0 0.0
      %587 = vmatpush2.msra.mxu0 0.0
      %588 = vmatprep.mubr.f32.mxu0 0.0
      %589 = vmatmul.mubr.f32.gmra.mxu0 %v519
      %v590 = vpop.f32.mrf.mxu0
      %v591 = vadd.f32 0.0, %v590
      %v592 = vpop.f32.mrf.mxu0
      %593 = vmatprep.mubr.f32.mxu0 0.0
      %594 = vmatmul.mubr.f32.gmra.mxu0 %v522
      %v595 = vpop.f32.mrf.mxu0
      %v596 = vadd.f32 0.0, %v595
      %v597 = vpop.f32.mrf.mxu0
      %598 = vdwg.mxu0
      %v599 = vmul.f32 %v509, %v509
      %v600 = vmul.f32 %v510, %v510
      %v601 = vsel %vm517, %v599, 0.0
      %602 = vadd.xlane.f32.xlu0 %v601
      %v603 = vpop.xlane.xlu0 %602
      %v604 = vsel %vm517, %v600, 0.0
      %605 = vadd.xlane.f32.xlu0 %v604
      %v606 = vpop.xlane.xlu0 %605
      %v607 = vmul.f32 %v591, 0.020833334
      %v608 = vmul.f32 %v596, 0.020833334
      %v609 = vmul.f32 %v603, 0.020833334
      %v610 = vmul.f32 %v606, 0.020833334
      %v611 = vmul.f32 %v607, %v607
      %v612 = vmul.f32 %v608, %v608
      %v613 = vsub.f32 %v609, %v611
      %v614 = vsub.f32 %v610, %v612
      %v615 = vmax.f32 %v613, 0.0
      %v616 = vmax.f32 %v614, 0.0
      %v617 = vadd.f32 %v615, 1e-05
      %v618 = vadd.f32 %v616, 1e-05
      %v619 = vrsqrt.pop %v617
      %v620 = vrsqrt.pop %v618
      %623 = vrot.lane.b32.xlu0 %v591, 127
      %v624 = vpop.permute.xlu0 %623
      %625 = vrot.lane.b32.xlu0 %v596, 127
      %v626 = vpop.permute.xlu0 %625
      %v629 = vmul.f32 %v619, %v624
      %v630 = vmul.f32 %v620, %v626
      %v631 = vmul.f32 %v629, 0.020833334
      %v632 = vmul.f32 %v630, 0.020833334
      %v633 = vld [vmem:[#allocation2] sm:$0x1]
      %v635 = vlaneseq
      %v636 = vshrl.u32 %v635, 7
      %v637 = vsub.s32 0, %v636
      %v638 = vrot.slane %v633, %v637
      %v640 = vadd.f32 %v631, %v638
      %v641 = vadd.f32 %v632, %v638
      %643 = vset.pattern.permute.xlu0 0
      %644 = vperm.xlu0 %643, %v619
      %v645 = vpop.permute.xlu0 %644
      %648 = vset.pattern.permute.xlu0 0
      %649 = vperm.xlu0 %648, %v620
      %v650 = vpop.permute.xlu0 %649
      %v652 = vmul.f32 %v509, %v645
      %v653 = vmul.f32 %v510, %v650
      %v654 = vsel %vm517, %v652, 0.0
      %v655 = vsel %vm517, %v653, 0.0
      %v656 = vadd.f32 %v654, %v655
      %v657 = vrot.slane %v656, 4
      %v658 = vadd.f32 %v656, %v657
      %v659 = vrot.slane %v658, 2
      %v660 = vadd.f32 %v658, %v659
      %v661 = vrot.slane %v660, 1
      %v662 = vadd.f32 %v660, %v661
      %v663 = vmul.f32 %v619, %v607
      %v664 = vmul.f32 %v620, %v608
      %vm665 = vcmask 7168
      %v666 = vsel %vm665, %v663, 0.0
      %v667 = vsel %vm665, %v664, 0.0
      %v668 = vadd.f32 %v666, %v667
      %v669 = vrot.slane %v668, 4
      %v670 = vadd.f32 %v668, %v669
      %v671 = vrot.slane %v670, 2
      %v672 = vadd.f32 %v670, %v671
      %v673 = vrot.slane %v672, 1
      %v674 = vadd.f32 %v672, %v673
      %676 = vset.pattern.permute.xlu0 0
      %677 = vperm.xlu0 %676, %v674
      %v678 = vpop.permute.xlu0 %677
      %v680 = vsub.f32 %v662, %v678
      %v681 = vld [vmem:[%s3] sm:$0x1]
      %v682 = vmul.f32 %v680, %v681
      %v683 = vld [vmem:[%s4] sm:$0x1]
      %v684 = vadd.f32 %v682, %v683
      %v685 = vmax.f32 %v640, 0.0
      %v686 = vmax.f32 %v641, 0.0
      %v687 = vld [vmem:[%s5] sm:$0xff]
      %v688 = vld [vmem:[%s5 + $0x8] sm:$0xff]
      %v689 = vld [vmem:[%s6] sm:$0x1]
      %692 = vset.pattern.permute.xlu0 0
      %693 = vperm.xlu0 %692, %v685
      %v694 = vpop.permute.xlu0 %693
      %695 = vset.pattern.permute.xlu0 0
      %696 = vperm.xlu0 %695, %v686
      %v697 = vpop.permute.xlu0 %696
      %v698 = vlaneseq
      %v699 = vand.u32 %v698, 127
      %v700 = vlaneseq
      %v701 = vshrl.u32 %v700, 7
      %v702 = vsub.s32 %v699, %v701
      %v703 = vrot.slane %v694, %v702
      %v704 = vadd.s32 %v699, 4294967288
      %v705 = vlaneseq
      %v706 = vshrl.u32 %v705, 7
      %v707 = vsub.s32 %v704, %v706
      %v708 = vrot.slane %v697, %v707
      %vm709 = vcmask 130112
      %v710 = vsel %vm709, %v708, %v703
      %vm711 = vcmask 130048
      %v712 = vsel %vm711, %v710, 0
      %714 = vmatprep.subr.mxu0 0.0
      %715 = vmatpush1.msra.mxu0 0.0
      %716 = vmatprep.subr.mxu0 0.0
      %717 = vmatpush1.msra.mxu0 0.0
      %718 = vmatprep.subr.mxu0 0.0
      %719 = vmatpush1.msra.mxu0 0.0
      %720 = vmatprep.subr.mxu0 0.0
      %721 = vmatpush1.msra.mxu0 0.0
      %722 = vmatprep.subr.mxu0 0.0
      %723 = vmatpush1.msra.mxu0 0.0
      %724 = vmatprep.subr.mxu0 0.0
      %725 = vmatpush1.msra.mxu0 0.0
      %726 = vmatprep.subr.mxu0 0.0
      %727 = vmatpush1.msra.mxu0 0.0
      %728 = vmatprep.subr.mxu0 0.0
      %729 = vmatpush1.msra.mxu0 0.0
      %730 = vmatprep.subr.mxu0 0.0
      %731 = vmatpush1.msra.mxu0 0.0
      %732 = vmatprep.subr.mxu0 0.0
      %733 = vmatpush1.msra.mxu0 0.0
      %734 = vmatprep.subr.mxu0 0.0
      %735 = vmatpush1.msra.mxu0 0.0
      %736 = vmatprep.subr.mxu0 0.0
      %737 = vmatpush1.msra.mxu0 0.0
      %738 = vmatprep.subr.mxu0 0.0
      %739 = vmatpush1.msra.mxu0 0.0
      %740 = vmatprep.subr.mxu0 0.0
      %741 = vmatpush1.msra.mxu0 0.0
      %742 = vmatprep.subr.mxu0 0.0
      %743 = vmatpush1.msra.mxu0 %v688
      %744 = vmatprep.subr.mxu0 0.0
      %745 = vmatpush1.msra.mxu0 %v687
      %746 = vmatprep.subr.mxu0 0.0
      %747 = vmatpush2.msra.mxu0 0.0
      %748 = vmatprep.subr.mxu0 0.0
      %749 = vmatpush2.msra.mxu0 0.0
      %750 = vmatprep.subr.mxu0 0.0
      %751 = vmatpush2.msra.mxu0 0.0
      %752 = vmatprep.subr.mxu0 0.0
      %753 = vmatpush2.msra.mxu0 0.0
      %754 = vmatprep.subr.mxu0 0.0
      %755 = vmatpush2.msra.mxu0 0.0
      %756 = vmatprep.subr.mxu0 0.0
      %757 = vmatpush2.msra.mxu0 0.0
      %758 = vmatprep.subr.mxu0 0.0
      %759 = vmatpush2.msra.mxu0 0.0
      %760 = vmatprep.subr.mxu0 0.0
      %761 = vmatpush2.msra.mxu0 0.0
      %762 = vmatprep.subr.mxu0 0.0
      %763 = vmatpush2.msra.mxu0 0.0
      %764 = vmatprep.subr.mxu0 0.0
      %765 = vmatpush2.msra.mxu0 0.0
      %766 = vmatprep.subr.mxu0 0.0
      %767 = vmatpush2.msra.mxu0 0.0
      %768 = vmatprep.subr.mxu0 0.0
      %769 = vmatpush2.msra.mxu0 0.0
      %770 = vmatprep.subr.mxu0 0.0
      %771 = vmatpush2.msra.mxu0 0.0
      %772 = vmatprep.subr.mxu0 0.0
      %773 = vmatpush2.msra.mxu0 0.0
      %774 = vmatprep.subr.mxu0 0.0
      %775 = vmatpush2.msra.mxu0 0.0
      %776 = vmatprep.subr.mxu0 0.0
      %777 = vmatpush2.msra.mxu0 0.0
      %778 = vmatprep.mubr.f32.mxu0 0.0
      %779 = vmatmul.mubr.f32.gmra.mxu0 %v712
      %v780 = vpop.f32.mrf.mxu0
      %v781 = vadd.f32 %v689, %v780
      %v782 = vpop.f32.mrf.mxu0
      %783 = vdwg.mxu0
      %v784 = vmax.f32 %v684, 0.0
      %v785 = vld [vmem:[%s7] sm:$0xff]
      %v786 = vld [vmem:[%s7 + $0x8] sm:$0xff]
      %v787 = vld [vmem:[%s7 + $0x10] sm:$0xff]
      %v788 = vld [vmem:[%s7 + $0x18] sm:$0xff]
      %v789 = vld [vmem:[%s7 + $0x20] sm:$0xff]
      %v790 = vld [vmem:[%s7 + $0x28] sm:$0xff]
      %v791 = vld [vmem:[%s8] sm:$0x1]
      %v793 = vsel %vm517, %v784, 0
      %795 = vmatprep.subr.mxu0 0.0
      %796 = vmatpush1.msra.mxu0 0.0
      %797 = vmatprep.subr.mxu0 0.0
      %798 = vmatpush1.msra.mxu0 0.0
      %799 = vmatprep.subr.mxu0 0.0
      %800 = vmatpush1.msra.mxu0 0.0
      %801 = vmatprep.subr.mxu0 0.0
      %802 = vmatpush1.msra.mxu0 0.0
      %803 = vmatprep.subr.mxu0 0.0
      %804 = vmatpush1.msra.mxu0 0.0
      %805 = vmatprep.subr.mxu0 0.0
      %806 = vmatpush1.msra.mxu0 0.0
      %807 = vmatprep.subr.mxu0 0.0
      %808 = vmatpush1.msra.mxu0 0.0
      %809 = vmatprep.subr.mxu0 0.0
      %810 = vmatpush1.msra.mxu0 0.0
      %811 = vmatprep.subr.mxu0 0.0
      %812 = vmatpush1.msra.mxu0 0.0
      %813 = vmatprep.subr.mxu0 0.0
      %814 = vmatpush1.msra.mxu0 0.0
      %815 = vmatprep.subr.mxu0 0.0
      %816 = vmatpush1.msra.mxu0 %v790
      %817 = vmatprep.subr.mxu0 0.0
      %818 = vmatpush1.msra.mxu0 %v789
      %819 = vmatprep.subr.mxu0 0.0
      %820 = vmatpush1.msra.mxu0 %v788
      %821 = vmatprep.subr.mxu0 0.0
      %822 = vmatpush1.msra.mxu0 %v787
      %823 = vmatprep.subr.mxu0 0.0
      %824 = vmatpush1.msra.mxu0 %v786
      %825 = vmatprep.subr.mxu0 0.0
      %826 = vmatpush1.msra.mxu0 %v785
      %827 = vmatprep.subr.mxu0 0.0
      %828 = vmatpush2.msra.mxu0 0.0
      %829 = vmatprep.subr.mxu0 0.0
      %830 = vmatpush2.msra.mxu0 0.0
      %831 = vmatprep.subr.mxu0 0.0
      %832 = vmatpush2.msra.mxu0 0.0
      %833 = vmatprep.subr.mxu0 0.0
      %834 = vmatpush2.msra.mxu0 0.0
      %835 = vmatprep.subr.mxu0 0.0
      %836 = vmatpush2.msra.mxu0 0.0
      %837 = vmatprep.subr.mxu0 0.0
      %838 = vmatpush2.msra.mxu0 0.0
      %839 = vmatprep.subr.mxu0 0.0
      %840 = vmatpush2.msra.mxu0 0.0
      %841 = vmatprep.subr.mxu0 0.0
      %842 = vmatpush2.msra.mxu0 0.0
      %843 = vmatprep.subr.mxu0 0.0
      %844 = vmatpush2.msra.mxu0 0.0
      %845 = vmatprep.subr.mxu0 0.0
      %846 = vmatpush2.msra.mxu0 0.0
      %847 = vmatprep.subr.mxu0 0.0
      %848 = vmatpush2.msra.mxu0 0.0
      %849 = vmatprep.subr.mxu0 0.0
      %850 = vmatpush2.msra.mxu0 0.0
      %851 = vmatprep.subr.mxu0 0.0
      %852 = vmatpush2.msra.mxu0 0.0
      %853 = vmatprep.subr.mxu0 0.0
      %854 = vmatpush2.msra.mxu0 0.0
      %855 = vmatprep.subr.mxu0 0.0
      %856 = vmatpush2.msra.mxu0 0.0
      %857 = vmatprep.subr.mxu0 0.0
      %858 = vmatpush2.msra.mxu0 0.0
      %859 = vmatprep.mubr.f32.mxu0 0.0
      %860 = vmatmul.mubr.f32.gmra.mxu0 %v793
      %v861 = vpop.f32.mrf.mxu0
      %v862 = vadd.f32 %v791, %v861
      %v863 = vpop.f32.mrf.mxu0
      %864 = vdwg.mxu0
      %v865 = vmax.f32 %v781, 0.0
      %v866 = vld [vmem:[%s9] sm:$0xff]
      %v867 = vld [vmem:[%s9 + $0x8] sm:$0xff]
      %v868 = vmax.f32 %v862, 0.0
      %v869 = vld [vmem:[%s10] sm:$0xff]
      %v870 = vld [vmem:[%s10 + $0x8] sm:$0xff]
      %v872 = vsel %vm711, %v868, 0
      %874 = vmatprep.subr.mxu0 0.0
      %875 = vmatpush1.msra.mxu0 0.0
      %876 = vmatprep.subr.mxu0 0.0
      %877 = vmatpush1.msra.mxu0 0.0
      %878 = vmatprep.subr.mxu0 0.0
      %879 = vmatpush1.msra.mxu0 0.0
      %880 = vmatprep.subr.mxu0 0.0
      %881 = vmatpush1.msra.mxu0 0.0
      %882 = vmatprep.subr.mxu0 0.0
      %883 = vmatpush1.msra.mxu0 0.0
      %884 = vmatprep.subr.mxu0 0.0
      %885 = vmatpush1.msra.mxu0 0.0
      %886 = vmatprep.subr.mxu0 0.0
      %887 = vmatpush1.msra.mxu0 0.0
      %888 = vmatprep.subr.mxu0 0.0
      %889 = vmatpush1.msra.mxu0 0.0
      %890 = vmatprep.subr.mxu0 0.0
      %891 = vmatpush1.msra.mxu0 0.0
      %892 = vmatprep.subr.mxu0 0.0
      %893 = vmatpush1.msra.mxu0 0.0
      %894 = vmatprep.subr.mxu0 0.0
      %895 = vmatpush1.msra.mxu0 0.0
      %896 = vmatprep.subr.mxu0 0.0
      %897 = vmatpush1.msra.mxu0 0.0
      %898 = vmatprep.subr.mxu0 0.0
      %899 = vmatpush1.msra.mxu0 0.0
      %900 = vmatprep.subr.mxu0 0.0
      %901 = vmatpush1.msra.mxu0 0.0
      %902 = vmatprep.subr.mxu0 0.0
      %903 = vmatpush1.msra.mxu0 %v870
      %904 = vmatprep.subr.mxu0 0.0
      %905 = vmatpush1.msra.mxu0 %v869
      %906 = vmatprep.subr.mxu0 0.0
      %907 = vmatpush2.msra.mxu0 0.0
      %908 = vmatprep.subr.mxu0 0.0
      %909 = vmatpush2.msra.mxu0 0.0
      %910 = vmatprep.subr.mxu0 0.0
      %911 = vmatpush2.msra.mxu0 0.0
      %912 = vmatprep.subr.mxu0 0.0
      %913 = vmatpush2.msra.mxu0 0.0
      %914 = vmatprep.subr.mxu0 0.0
      %915 = vmatpush2.msra.mxu0 0.0
      %916 = vmatprep.subr.mxu0 0.0
      %917 = vmatpush2.msra.mxu0 0.0
      %918 = vmatprep.subr.mxu0 0.0
      %919 = vmatpush2.msra.mxu0 0.0
      %920 = vmatprep.subr.mxu0 0.0
      %921 = vmatpush2.msra.mxu0 0.0
      %922 = vmatprep.subr.mxu0 0.0
      %923 = vmatpush2.msra.mxu0 0.0
      %924 = vmatprep.subr.mxu0 0.0
      %925 = vmatpush2.msra.mxu0 0.0
      %926 = vmatprep.subr.mxu0 0.0
      %927 = vmatpush2.msra.mxu0 0.0
      %928 = vmatprep.subr.mxu0 0.0
      %929 = vmatpush2.msra.mxu0 0.0
      %930 = vmatprep.subr.mxu0 0.0
      %931 = vmatpush2.msra.mxu0 0.0
      %932 = vmatprep.subr.mxu0 0.0
      %933 = vmatpush2.msra.mxu0 0.0
      %934 = vmatprep.subr.mxu0 0.0
      %935 = vmatpush2.msra.mxu0 0.0
      %936 = vmatprep.subr.mxu0 0.0
      %937 = vmatpush2.msra.mxu0 0.0
      %938 = vmatprep.mubr.f32.mxu0 0.0
      %939 = vmatmul.mubr.f32.gmra.mxu0 %v872
      %v940 = vpop.f32.mrf.mxu0
      %v941 = vadd.f32 0.0, %v940
      %v942 = vpop.f32.mrf.mxu0
      %943 = vdwg.mxu0
      %v945 = vsel %vm711, %v865, 0
      %947 = vmatprep.subr.mxu0 0.0
      %948 = vmatpush1.msra.mxu0 0.0
      %949 = vmatprep.subr.mxu0 0.0
      %950 = vmatpush1.msra.mxu0 0.0
      %951 = vmatprep.subr.mxu0 0.0
      %952 = vmatpush1.msra.mxu0 0.0
      %953 = vmatprep.subr.mxu0 0.0
      %954 = vmatpush1.msra.mxu0 0.0
      %955 = vmatprep.subr.mxu0 0.0
      %956 = vmatpush1.msra.mxu0 0.0
      %957 = vmatprep.subr.mxu0 0.0
      %958 = vmatpush1.msra.mxu0 0.0
      %959 = vmatprep.subr.mxu0 0.0
      %960 = vmatpush1.msra.mxu0 0.0
      %961 = vmatprep.subr.mxu0 0.0
      %962 = vmatpush1.msra.mxu0 0.0
      %963 = vmatprep.subr.mxu0 0.0
      %964 = vmatpush1.msra.mxu0 0.0
      %965 = vmatprep.subr.mxu0 0.0
      %966 = vmatpush1.msra.mxu0 0.0
      %967 = vmatprep.subr.mxu0 0.0
      %968 = vmatpush1.msra.mxu0 0.0
      %969 = vmatprep.subr.mxu0 0.0
      %970 = vmatpush1.msra.mxu0 0.0
      %971 = vmatprep.subr.mxu0 0.0
      %972 = vmatpush1.msra.mxu0 0.0
      %973 = vmatprep.subr.mxu0 0.0
      %974 = vmatpush1.msra.mxu0 0.0
      %975 = vmatprep.subr.mxu0 0.0
      %976 = vmatpush1.msra.mxu0 %v867
      %977 = vmatprep.subr.mxu0 0.0
      %978 = vmatpush1.msra.mxu0 %v866
      %979 = vmatprep.subr.mxu0 0.0
      %980 = vmatpush2.msra.mxu0 0.0
      %981 = vmatprep.subr.mxu0 0.0
      %982 = vmatpush2.msra.mxu0 0.0
      %983 = vmatprep.subr.mxu0 0.0
      %984 = vmatpush2.msra.mxu0 0.0
      %985 = vmatprep.subr.mxu0 0.0
      %986 = vmatpush2.msra.mxu0 0.0
      %987 = vmatprep.subr.mxu0 0.0
      %988 = vmatpush2.msra.mxu0 0.0
      %989 = vmatprep.subr.mxu0 0.0
      %990 = vmatpush2.msra.mxu0 0.0
      %991 = vmatprep.subr.mxu0 0.0
      %992 = vmatpush2.msra.mxu0 0.0
      %993 = vmatprep.subr.mxu0 0.0
      %994 = vmatpush2.msra.mxu0 0.0
      %995 = vmatprep.subr.mxu0 0.0
      %996 = vmatpush2.msra.mxu0 0.0
      %997 = vmatprep.subr.mxu0 0.0
      %998 = vmatpush2.msra.mxu0 0.0
      %999 = vmatprep.subr.mxu0 0.0
      %1000 = vmatpush2.msra.mxu0 0.0
      %1001 = vmatprep.subr.mxu0 0.0
      %1002 = vmatpush2.msra.mxu0 0.0
      %1003 = vmatprep.subr.mxu0 0.0
      %1004 = vmatpush2.msra.mxu0 0.0
      %1005 = vmatprep.subr.mxu0 0.0
      %1006 = vmatpush2.msra.mxu0 0.0
      %1007 = vmatprep.subr.mxu0 0.0
      %1008 = vmatpush2.msra.mxu0 0.0
      %1009 = vmatprep.subr.mxu0 0.0
      %1010 = vmatpush2.msra.mxu0 0.0
      %1011 = vmatprep.mubr.f32.mxu0 0.0
      %1012 = vmatmul.mubr.f32.gmra.mxu0 %v945
      %v1013 = vpop.f32.mrf.mxu0
      %v1014 = vadd.f32 %v941, %v1013
      %v1015 = vpop.f32.mrf.mxu0
      %1016 = vdwg.mxu0
      %v1017 = vld [vmem:[%s11] sm:$0x1]
      %v1018 = vadd.f32 %v1014, %v1017
      %v1019 = vmax.f32 %v1018, 0.0
      %v1020 = vld [vmem:[%s12] sm:$0x3]
      %v1021 = vld [vmem:[#allocation3] sm:$0x1]
      %vm1022 = vcmask 15360
      %v1024 = vsel %vm1022, %v1019, 0
      %vm1026 = vcmask 1041408
      %v1028 = vsel %vm1026, %v1020, 0
      %1030 = vmatprep.subr.mxu0 0.0
      %1031 = vmatpush1.msra.mxu0 0.0
      %1032 = vmatprep.subr.mxu0 0.0
      %1033 = vmatpush1.msra.mxu0 0.0
      %1034 = vmatprep.subr.mxu0 0.0
      %1035 = vmatpush1.msra.mxu0 0.0
      %1036 = vmatprep.subr.mxu0 0.0
      %1037 = vmatpush1.msra.mxu0 0.0
      %1038 = vmatprep.subr.mxu0 0.0
      %1039 = vmatpush1.msra.mxu0 0.0
      %1040 = vmatprep.subr.mxu0 0.0
      %1041 = vmatpush1.msra.mxu0 0.0
      %1042 = vmatprep.subr.mxu0 0.0
      %1043 = vmatpush1.msra.mxu0 0.0
      %1044 = vmatprep.subr.mxu0 0.0
      %1045 = vmatpush1.msra.mxu0 0.0
      %1046 = vmatprep.subr.mxu0 0.0
      %1047 = vmatpush1.msra.mxu0 0.0
      %1048 = vmatprep.subr.mxu0 0.0
      %1049 = vmatpush1.msra.mxu0 0.0
      %1050 = vmatprep.subr.mxu0 0.0
      %1051 = vmatpush1.msra.mxu0 0.0
      %1052 = vmatprep.subr.mxu0 0.0
      %1053 = vmatpush1.msra.mxu0 0.0
      %1054 = vmatprep.subr.mxu0 0.0
      %1055 = vmatpush1.msra.mxu0 0.0
      %1056 = vmatprep.subr.mxu0 0.0
      %1057 = vmatpush1.msra.mxu0 0.0
      %1058 = vmatprep.subr.mxu0 0.0
      %1059 = vmatpush1.msra.mxu0 0.0
      %1060 = vmatprep.subr.mxu0 0.0
      %1061 = vmatpush1.msra.mxu0 %v1028
      %1062 = vmatprep.subr.mxu0 0.0
      %1063 = vmatpush2.msra.mxu0 0.0
      %1064 = vmatprep.subr.mxu0 0.0
      %1065 = vmatpush2.msra.mxu0 0.0
      %1066 = vmatprep.subr.mxu0 0.0
      %1067 = vmatpush2.msra.mxu0 0.0
      %1068 = vmatprep.subr.mxu0 0.0
      %1069 = vmatpush2.msra.mxu0 0.0
      %1070 = vmatprep.subr.mxu0 0.0
      %1071 = vmatpush2.msra.mxu0 0.0
      %1072 = vmatprep.subr.mxu0 0.0
      %1073 = vmatpush2.msra.mxu0 0.0
      %1074 = vmatprep.subr.mxu0 0.0
      %1075 = vmatpush2.msra.mxu0 0.0
      %1076 = vmatprep.subr.mxu0 0.0
      %1077 = vmatpush2.msra.mxu0 0.0
      %1078 = vmatprep.subr.mxu0 0.0
      %1079 = vmatpush2.msra.mxu0 0.0
      %1080 = vmatprep.subr.mxu0 0.0
      %1081 = vmatpush2.msra.mxu0 0.0
      %1082 = vmatprep.subr.mxu0 0.0
      %1083 = vmatpush2.msra.mxu0 0.0
      %1084 = vmatprep.subr.mxu0 0.0
      %1085 = vmatpush2.msra.mxu0 0.0
      %1086 = vmatprep.subr.mxu0 0.0
      %1087 = vmatpush2.msra.mxu0 0.0
      %1088 = vmatprep.subr.mxu0 0.0
      %1089 = vmatpush2.msra.mxu0 0.0
      %1090 = vmatprep.subr.mxu0 0.0
      %1091 = vmatpush2.msra.mxu0 0.0
      %1092 = vmatprep.subr.mxu0 0.0
      %1093 = vmatpush2.msra.mxu0 0.0
      %1094 = vmatprep.mubr.f32.mxu0 0.0
      %1095 = vmatmul.mubr.f32.gmra.mxu0 %v1024
      %v1096 = vpop.f32.mrf.mxu0
      %v1097 = vadd.f32 %v1021, %v1096
      %v1098 = vpop.f32.mrf.mxu0
      %1099 = vdwg.mxu0
      %v1100 = vld [vmem:[%s505] sm:$0x1]
      %v1101 = vadd.f32 %v1097, %v1100
      %v1102 = vmul.f32 %v1101, 0.2
      %v1103 = vsub.f32 0.0, %v1102
      %v1104 = vmul.f32 %v1103, 1.442695
      %v1105 = vpow.pop %v1104
      %v1106 = vadd.f32 %v1105, 1.0
      %v1107 = vrcp.pop %v1106
      %v1108 = vmul.f32 1.0, %v1107
      %vm1109 = vcmp.ge.f32.partialorder %v1108, 0.5
      %v1110 = vsel %vm1109, 1, 0
      %v1111 = vcvt.s32.f32 %v1110
      %v1112 = vsub.f32 %v1111, %v1108
      %v1113 = vadd.f32 %v1112, %v1108
      %vm1114 = vcmask 0
      %1115 = vst.msk [vmem:[%s508] sm:$0x1] %vm1114, %v1113
      %p1116 = scmp.lt.s32.totalorder %s30, 1
      %s1117 = scalar_select %p1116, %s30, 1
      %s1118 = scalar_lea.vmem %s15, %s1117
      // Predicated region
      $region81: #{tpu_custom_call.1} parent=79 // pred_check
        %p1119 = pneg %p373
      $region82: #{tpu_custom_call.1} parent=79 // pred_check_branch
        %1121 = sbr.rel (%p1119) target = $region84
      $region83: #{tpu_custom_call.1} parent=79 // pred_region
        _
      $region84: #{tpu_custom_call.1} parent=79 // pred_fallthru
        _
    $region80: #{tpu_custom_call.1} parent=5 // pred_fallthru
      _
    %p1122 = scmp.le.s32.totalorder 2, %s25
    // Predicated region
    $region85: #{tpu_custom_call.1} parent=5 // pred_check
      %p1123 = pneg %p1122
    $region86: #{tpu_custom_call.1} parent=5 // pred_check_branch
      %1125 = sbr.rel (%p1123) target = $region88
    $region87: #{tpu_custom_call.1} parent=5 // pred_region
      %s1126 = ssub.s32 %s25, 2
      // Predicated region
      $region89: #{tpu_custom_call.1} parent=87 // pred_check
        %p1127 = pneg %p379
      $region90: #{tpu_custom_call.1} parent=87 // pred_check_branch
        %1129 = sbr.rel (%p1127) target = $region92
      $region91: #{tpu_custom_call.1} parent=87 // pred_region
        %p1130 = scmp.lt.s32.totalorder %s31, 1
        %s1131 = scalar_select %p1130, %s31, 1
        %s1132 = scalar_lea.vmem %s15, %s1131
      $region92: #{tpu_custom_call.1} parent=87 // pred_fallthru
        _
    $region88: #{tpu_custom_call.1} parent=5 // pred_fallthru
      _
  $region6: #{tpu_custom_call.1} parent=0 // loop_footer
    %s29 = sadd.s32 1, %s25
  $region7: #{tpu_custom_call.1} parent=0 // loop_footer_branch
    %24 = sbr.rel target = $region3
  $region8: #{tpu_custom_call.1} parent=0 // loop_exit
    _

</llo_original>
